<compile_context>
chip_gen: v7x
topology: tpu7x:2x2x1
jax: 0.10.0
libtpu: 0.0.40
codegen_flags: <defaults>
</compile_context>

<pallas_src>
import functools

import jax
import jax.numpy as jnp
from jax.experimental import pallas as pl
from jax.experimental.pallas import tpu as pltpu


_COMPUTE_DTYPE = jnp.bfloat16  # native MXU operand format on v5e/v6e/v7x


def _round_up(x, m):
    return (x + m - 1) // m * m


def _vmem_limit(block_bytes):
    # Double-buffered working set + headroom; capped so it also leaves
    # headroom on v7x (64 MiB VMEM per TensorCore).
    return int(min(max(2 * block_bytes + (8 << 20), 32 << 20), 48 << 20))


# ----------------------------------------------------------------------------
# Fused 1x1-conv kernel: out = act( (x @ w) * scale + shift [+ residual] )
# Full-K resident, grid = (M tiles, N tiles), no accumulator scratch.
# ----------------------------------------------------------------------------
def _mm_bn_act_kernel(x_ref, w_ref, s_ref, b_ref, *rest, relu, residual):
    if residual:
        res_ref, o_ref = rest
    else:
        (o_ref,) = rest
    y = jnp.dot(x_ref[...], w_ref[...], preferred_element_type=jnp.float32)
    y = y * s_ref[...] + b_ref[...]
    if residual:
        y = y + res_ref[...].astype(jnp.float32)
    if relu:
        y = jnp.maximum(y, 0.0)
    o_ref[...] = y.astype(o_ref.dtype)


def matmul_bn_act(x2d, w, scale, shift, *, relu=True, residual=None,
                  tm=256, tn=512, out_dtype=None):
    """Fused (x2d @ w) * scale + shift (+ residual) (+ ReLU) on TPU.

    x2d: (M, K); w: (K, N); scale/shift: (N,); residual: (M, N) or None.
    Operands are cast to bf16 in the wrapper; accumulation is f32.
    """
    M, K = x2d.shape
    Kw, N = w.shape
    assert K == Kw, (K, Kw)
    out_dtype = out_dtype or x2d.dtype

    x_c = x2d.astype(_COMPUTE_DTYPE)
    w_c = w.astype(_COMPUTE_DTYPE)
    s2 = scale.reshape(1, N).astype(jnp.float32)
    b2 = shift.reshape(1, N).astype(jnp.float32)

    # Row tile: ragged last tile handled by Pallas (no jnp.pad copy of x).
    tm_eff = min(tm, _round_up(M, 8))
    if pl.cdiv(M, tm_eff) == 1 and M >= 256:
        # At least 2 M tiles so the "parallel" axis splits across both TCs.
        tm_eff = _round_up(pl.cdiv(M, 2), 8)

    # N tile: keep full N resident unless the bf16 working set gets large.
    full_n_bytes = (K * N + tm_eff * N) * 2 + tm_eff * N * 4
    tn_eff = tn if (full_n_bytes > (12 << 20) and N % tn == 0) else N

    inputs = [x_c, w_c, s2, b2]
    in_specs = [
        pl.BlockSpec((tm_eff, K), lambda i, j: (i, 0)),      # activations
        pl.BlockSpec((K, tn_eff), lambda i, j: (0, j)),      # weights (resident)
        pl.BlockSpec((1, tn_eff), lambda i, j: (0, j)),      # BN scale
        pl.BlockSpec((1, tn_eff), lambda i, j: (0, j)),      # BN shift
    ]
    has_res = residual is not None
    if has_res:
        inputs.append(residual.astype(_COMPUTE_DTYPE))
        in_specs.append(pl.BlockSpec((tm_eff, tn_eff), lambda i, j: (i, j)))

    grid = (pl.cdiv(M, tm_eff), N // tn_eff)

    block_bytes = ((tm_eff * K + K * tn_eff
                    + tm_eff * tn_eff * (1 + int(has_res))) * 2
                   + tm_eff * tn_eff * 4 + 2 * tn_eff * 4)
    cost = pl.CostEstimate(
        flops=2 * M * K * N,
        transcendentals=0,
        bytes_accessed=2 * (x_c.size + w_c.size + (1 + int(has_res)) * M * N),
    )

    kernel = functools.partial(_mm_bn_act_kernel, relu=relu, residual=has_res)

    return pl.pallas_call(
        kernel,
        out_shape=jax.ShapeDtypeStruct((M, N), out_dtype),
        grid_spec=pltpu.PrefetchScalarGridSpec(
            num_scalar_prefetch=0,
            grid=grid,
            in_specs=in_specs,
            out_specs=pl.BlockSpec((tm_eff, tn_eff), lambda i, j: (i, j)),
        ),
        compiler_params=pltpu.CompilerParams(
            dimension_semantics=("parallel", "parallel"),
            vmem_limit_bytes=_vmem_limit(block_bytes),
        ),
        cost_estimate=cost,
    )(*inputs)


# ----------------------------------------------------------------------------
# Fused 3x3-conv kernel (stride 1): out = relu( conv3x3(x) * scale + shift )
# The conv is 9 shifted row-slices of the padded, flattened image matmul'ed
# against the 9 per-tap (C, Cout) weight slabs -- no HBM im2col tensor.
# ----------------------------------------------------------------------------
def _conv3x3_bn_relu_kernel(x_ref, w_ref, s_ref, b_ref, o_ref, *, taps, rows):
    acc = jnp.dot(x_ref[0, pl.ds(taps[0], rows), :], w_ref[0],
                  preferred_element_type=jnp.float32)
    for t in range(1, 9):
        acc = acc + jnp.dot(x_ref[0, pl.ds(taps[t], rows), :], w_ref[t],
                            preferred_element_type=jnp.float32)
    y = acc * s_ref[...] + b_ref[...]
    y = jnp.maximum(y, 0.0)
    o_ref[0] = y.astype(o_ref.dtype)


def conv3x3_bn_relu(x_nhwc, w_hwio, scale, shift, *, dilation=1,
                    out_dtype=None):
    """Fused 3x3 conv (stride 1, padding = dilation) + BN + ReLU, NHWC."""
    B, H, W, C = x_nhwc.shape
    Cout = w_hwio.shape[-1]
    d = dilation
    out_dtype = out_dtype or x_nhwc.dtype
    Wp = W + 2 * d

    # Pad d on top/left/right and 2*d on the bottom so every shifted flat
    # row-slice of length H*Wp stays in bounds.
    xp = jnp.pad(x_nhwc, ((0, 0), (d, 2 * d), (d, d), (0, 0)))
    xp = xp.astype(_COMPUTE_DTYPE).reshape(B, (H + 3 * d) * Wp, C)
    w9 = w_hwio.reshape(9, C, Cout).astype(_COMPUTE_DTYPE)
    s2 = scale.reshape(1, Cout).astype(jnp.float32)
    b2 = shift.reshape(1, Cout).astype(jnp.float32)

    rows_in = (H + 3 * d) * Wp
    rows_out = H * Wp
    taps = tuple(dy * d * Wp + dx * d for dy in range(3) for dx in range(3))

    block_bytes = ((rows_in * C + 9 * C * Cout + rows_out * Cout) * 2
                   + rows_out * Cout * 4 + 2 * Cout * 4)
    cost = pl.CostEstimate(
        flops=2 * B * rows_out * 9 * C * Cout,
        transcendentals=0,
        bytes_accessed=2 * (xp.size + w9.size + B * rows_out * Cout),
    )

    kernel = functools.partial(_conv3x3_bn_relu_kernel, taps=taps,
                               rows=rows_out)

    y = pl.pallas_call(
        kernel,
        out_shape=jax.ShapeDtypeStruct((B, rows_out, Cout), out_dtype),
        grid_spec=pltpu.PrefetchScalarGridSpec(
            num_scalar_prefetch=0,
            grid=(B,),
            in_specs=[
                pl.BlockSpec((1, rows_in, C), lambda b: (b, 0, 0)),
                pl.BlockSpec((9, C, Cout), lambda b: (0, 0, 0)),
                pl.BlockSpec((1, Cout), lambda b: (0, 0)),
                pl.BlockSpec((1, Cout), lambda b: (0, 0)),
            ],
            out_specs=pl.BlockSpec((1, rows_out, Cout), lambda b: (b, 0, 0)),
        ),
        compiler_params=pltpu.CompilerParams(
            dimension_semantics=("parallel",),
            vmem_limit_bytes=_vmem_limit(block_bytes),
        ),
        cost_estimate=cost,
    )(xp, w9, s2, b2)

    # Only the first W columns of each Wp-wide row group are valid outputs.
    return y.reshape(B, H, Wp, Cout)[:, :, :W, :]


# ----------------------------------------------------------------------------
# Bottleneck forward
# ----------------------------------------------------------------------------
def _fold_bn(gamma, beta, mean, var, eps=1e-5):
    scale = gamma / jnp.sqrt(var + eps)
    shift = beta - mean * scale
    return scale, shift


def _im2col_3x3(x_nhwc, *, stride=1, dilation=1):
    """Fallback (stride > 1): 3x3 patches (pad = dilation) -> (B*Ho*Wo, 9*C)."""
    B, H, W, C = x_nhwc.shape
    pad = dilation
    Ho = (H + 2 * pad - dilation * 2 - 1) // stride + 1
    Wo = (W + 2 * pad - dilation * 2 - 1) // stride + 1
    xp = jnp.pad(x_nhwc, ((0, 0), (pad, pad), (pad, pad), (0, 0)))
    cols = []
    for dy in range(3):
        for dx in range(3):
            y0 = dy * dilation
            x0 = dx * dilation
            cols.append(xp[:, y0:y0 + (Ho - 1) * stride + 1:stride,
                           x0:x0 + (Wo - 1) * stride + 1:stride, :])
    patches = jnp.concatenate(cols, axis=-1)
    return patches.reshape(B * Ho * Wo, 9 * C), Ho, Wo


def bottleneck_forward(x_nchw, params, *, stride=1, dilation=1, tm=256):
    """ResNet Bottleneck forward (inference-mode BatchNorm).

    params:
      conv1_w (Cin, width), conv2_w (3, 3, width, width) HWIO,
      conv3_w (width, Cout), bn1/bn2/bn3 = (gamma, beta, mean, var),
      optional ds_w (Cin, Cout) + bn_ds for the downsample path.
    """
    B, Cin, H, W = x_nchw.shape
    x_nhwc = jnp.transpose(x_nchw, (0, 2, 3, 1))

    w1, w2, w3 = params["conv1_w"], params["conv2_w"], params["conv3_w"]
    s1, t1 = _fold_bn(*params["bn1"])
    s2, t2 = _fold_bn(*params["bn2"])
    s3, t3 = _fold_bn(*params["bn3"])
    width = w1.shape[1]
    Cout = w3.shape[1]
    out_dtype = x_nchw.dtype

    x2d = x_nhwc.reshape(B * H * W, Cin)

    # conv1 (1x1) -> bn1 -> relu ; intermediate activation kept in bf16.
    h1 = matmul_bn_act(x2d, w1, s1, t1, relu=True, tm=tm,
                       out_dtype=_COMPUTE_DTYPE)
    h1 = h1.reshape(B, H, W, width)

    # conv2 (3x3, stride, pad=dilation) -> bn2 -> relu
    if stride == 1:
        h2 = conv3x3_bn_relu(h1, w2, s2, t2, dilation=dilation,
                             out_dtype=_COMPUTE_DTYPE)
        Ho, Wo = H, W
        h2 = h2.reshape(B * Ho * Wo, width)
    else:
        # TODO(synk): strided 3x3 conv falls back to wrapper-side im2col.
        patches, Ho, Wo = _im2col_3x3(h1, stride=stride, dilation=dilation)
        h2 = matmul_bn_act(patches, w2.reshape(9 * width, width), s2, t2,
                           relu=True, tm=tm, out_dtype=_COMPUTE_DTYPE)

    # identity path
    if "ds_w" in params:
        sd, td = _fold_bn(*params["bn_ds"])
        x_s = x_nhwc[:, ::stride, ::stride, :]
        identity = matmul_bn_act(x_s.reshape(-1, Cin), params["ds_w"], sd, td,
                                 relu=False, tm=tm, out_dtype=_COMPUTE_DTYPE)
    else:
        assert stride == 1 and Cin == Cout, "identity path needs downsample"
        identity = x2d.astype(_COMPUTE_DTYPE)

    # conv3 (1x1) -> bn3 -> add identity -> relu (all fused in one kernel)
    out2d = matmul_bn_act(h2, w3, s3, t3, relu=True, residual=identity,
                          tm=tm, out_dtype=out_dtype)
    out = out2d.reshape(B, Ho, Wo, Cout)
    return jnp.transpose(out, (0, 3, 1, 2))


# ----------------------------------------------------------------------------
# Pure-JAX reference (inference-mode BatchNorm), for correctness check
# ----------------------------------------------------------------------------
def bottleneck_ref(x_nchw, params, *, stride=1, dilation=1, eps=1e-5):
    hp = jax.lax.Precision.HIGHEST
    x = jnp.transpose(x_nchw, (0, 2, 3, 1)).astype(jnp.float32)

    def bn(y, p):
        gamma, beta, mean, var = p
        return (y - mean) / jnp.sqrt(var + eps) * gamma + beta

    h = jnp.einsum("bhwc,co->bhwo", x, params["conv1_w"], precision=hp)
    h = jax.nn.relu(bn(h, params["bn1"]))
    h = jax.lax.conv_general_dilated(
        h, params["conv2_w"], window_strides=(stride, stride),
        padding=((dilation, dilation), (dilation, dilation)),
        rhs_dilation=(dilation, dilation),
        dimension_numbers=("NHWC", "HWIO", "NHWC"), precision=hp)
    h = jax.nn.relu(bn(h, params["bn2"]))
    h = jnp.einsum("bhwc,co->bhwo", h, params["conv3_w"], precision=hp)
    h = bn(h, params["bn3"])
    if "ds_w" in params:
        ident = jnp.einsum("bhwc,co->bhwo", x[:, ::stride, ::stride, :],
                           params["ds_w"], precision=hp)
        ident = bn(ident, params["bn_ds"])
    else:
        ident = x
    out = jax.nn.relu(h + ident)
    return jnp.transpose(out, (0, 3, 1, 2))


if __name__ == "__main__":
    # Small Bottleneck: inplanes=16, planes=4 -> width=4, out channels=16,
    # stride=1, groups=1, dilation=1, downsample=None (identity add valid).
    B, inplanes, planes, H, W = 2, 16, 4, 16, 16
    expansion = 4
    width = planes                      # base_width=64, groups=1
    Cout = planes * expansion           # == inplanes, so no downsample

    key = jax.random.PRNGKey(0)
    keys = jax.random.split(key, 8)

    x = jax.random.normal(keys[0], (B, inplanes, H, W), dtype=jnp.float32)

    def bn_params(k, c):
        k1, k2, k3, k4 = jax.random.split(k, 4)
        gamma = 1.0 + 0.1 * jax.random.normal(k1, (c,), jnp.float32)
        beta = 0.1 * jax.random.normal(k2, (c,), jnp.float32)
        mean = 0.1 * jax.random.normal(k3, (c,), jnp.float32)
        var = 1.0 + 0.1 * jnp.abs(jax.random.normal(k4, (c,), jnp.float32))
        return (gamma, beta, mean, var)

    params = {
        "conv1_w": 0.1 * jax.random.normal(keys[1], (inplanes, width),
                                           jnp.float32),
        "bn1": bn_params(keys[2], width),
        "conv2_w": 0.1 * jax.random.normal(keys[3], (3, 3, width, width),
                                           jnp.float32),
        "bn2": bn_params(keys[4], width),
        "conv3_w": 0.1 * jax.random.normal(keys[5], (width, Cout),
                                           jnp.float32),
        "bn3": bn_params(keys[6], Cout),
    }

    out = bottleneck_forward(x, params, stride=1, dilation=1, tm=256)
    out = jax.block_until_ready(out)

    ref = bottleneck_ref(x, params, stride=1, dilation=1)
    assert out.shape == (B, Cout, H, W), out.shape
    max_err = float(jnp.max(jnp.abs(out.astype(jnp.float32) - ref)))
    ref_scale = float(jnp.max(jnp.abs(ref)))
    tol = 5e-2 * (ref_scale + 1.0)   # bf16 MXU operands -> looser tolerance
    assert max_err < tol, f"mismatch vs reference: max abs err {max_err} (tol {tol})"

    print("KERNEL_OK")
</pallas_src>

<mosaic_0001>
module attributes {stable_mosaic.version = 11 : i64} {
  func.func @_mm_bn_act_kernel(%arg0: i32, %arg1: i32, %arg2: memref<256x16xbf16, #tpu.memory_space<vmem>>, %arg3: memref<16x4xbf16, #tpu.memory_space<vmem>>, %arg4: memref<1x4xf32, #tpu.memory_space<vmem>>, %arg5: memref<1x4xf32, #tpu.memory_space<vmem>>, %arg6: memref<256x4xbf16, #tpu.memory_space<vmem>>) attributes {dimension_semantics = [#tpu.dimension_semantics<parallel>, #tpu.dimension_semantics<parallel>], iteration_bounds = array<i64: 2, 1>, scalar_prefetch = 0 : i64, scratch_operands = 0 : i64, tpu.core_type = #tpu.core_type<tc>, window_params = [{transform_indices = @transform_0, window_bounds = array<i64: 256, 16>}, {transform_indices = @transform_1, window_bounds = array<i64: 16, 4>}, {transform_indices = @transform_2, window_bounds = array<i64: 1, 4>}, {transform_indices = @transform_3, window_bounds = array<i64: 1, 4>}, {transform_indices = @transform_4, window_bounds = array<i64: 256, 4>}]} {
    %c0 = arith.constant 0 : index
    %c0_0 = arith.constant 0 : index
    %0 = vector.load %arg2[%c0, %c0_0] : memref<256x16xbf16, #tpu.memory_space<vmem>>, vector<256x16xbf16>
    %c0_1 = arith.constant 0 : index
    %c0_2 = arith.constant 0 : index
    %1 = vector.load %arg3[%c0_1, %c0_2] : memref<16x4xbf16, #tpu.memory_space<vmem>>, vector<16x4xbf16>
    %cst = arith.constant dense<0.000000e+00> : vector<256x4xf32>
    %2 = tpu.matmul %0, %1, %cst {dimension_numbers = #tpu.dot_dimension_numbers<[1], [0], [0], [1], [0, 0, 1, 1], [], []>} : vector<256x16xbf16>, vector<16x4xbf16>, vector<256x4xf32> -> vector<256x4xf32>
    %c0_3 = arith.constant 0 : index
    %c0_4 = arith.constant 0 : index
    %3 = vector.load %arg4[%c0_3, %c0_4] : memref<1x4xf32, #tpu.memory_space<vmem>>, vector<1x4xf32>
    %4 = vector.broadcast %3 : vector<1x4xf32> to vector<256x4xf32>
    %5 = arith.mulf %2, %4 : vector<256x4xf32>
    %c0_5 = arith.constant 0 : index
    %c0_6 = arith.constant 0 : index
    %6 = vector.load %arg5[%c0_5, %c0_6] : memref<1x4xf32, #tpu.memory_space<vmem>>, vector<1x4xf32>
    %7 = vector.broadcast %6 : vector<1x4xf32> to vector<256x4xf32>
    %8 = arith.addf %5, %7 : vector<256x4xf32>
    %cst_7 = arith.constant 0.000000e+00 : f32
    %9 = vector.broadcast %cst_7 : f32 to vector<256x4xf32>
    %10 = arith.maximumf %8, %9 : vector<256x4xf32>
    %11 = arith.truncf %10 : vector<256x4xf32> to vector<256x4xbf16>
    %c0_8 = arith.constant 0 : index
    %c0_9 = arith.constant 0 : index
    %12 = vector.load %arg6[%c0_8, %c0_9] : memref<256x4xbf16, #tpu.memory_space<vmem>>, vector<256x4xbf16>
    tpu.vector_store %arg6[%c0_8, %c0_9], %11 {strides = array<i32>} : memref<256x4xbf16, #tpu.memory_space<vmem>>, vector<256x4xbf16>,
    return
  }
  func.func @transform_0(%arg0: i32, %arg1: i32) -> (i32, i32) {
    %c0_i32 = arith.constant 0 : i32
    %c0_i32_0 = arith.constant 0 : i32
    return %arg0, %c0_i32 : i32, i32
  }
  func.func @transform_1(%arg0: i32, %arg1: i32) -> (i32, i32) {
    %c0_i32 = arith.constant 0 : i32
    %c0_i32_0 = arith.constant 0 : i32
    return %c0_i32, %arg1 : i32, i32
  }
  func.func @transform_2(%arg0: i32, %arg1: i32) -> (i32, i32) {
    %c0_i32 = arith.constant 0 : i32
    %c0_i32_0 = arith.constant 0 : i32
    return %c0_i32, %arg1 : i32, i32
  }
  func.func @transform_3(%arg0: i32, %arg1: i32) -> (i32, i32) {
    %c0_i32 = arith.constant 0 : i32
    %c0_i32_0 = arith.constant 0 : i32
    return %c0_i32, %arg1 : i32, i32
  }
  func.func @transform_4(%arg0: i32, %arg1: i32) -> (i32, i32) {
    %c0_i32 = arith.constant 0 : i32
    return %arg0, %arg1 : i32, i32
  }
}

</mosaic_0001>

<llo_original>
// kernel: tpu_custom_call.1
$region0: #{tpu_custom_call.1}
  #allocation0 [shape = 'u32[]', space=smem, size = 0x4, offset = 0x4, fixed_abs, tag = 'smem constant byte address 0x4 - core index']
  #allocation1 [shape = 'u32[144,128]{1,0:T(1,128)}', space=vmem, size = 0x12000, scoped, tag = 'internal scratch']
  %s0 = inlined_call_operand.vmem [shape: bf16[512,16], index: 0, kind: input, shape index: {}]
  %s1 = inlined_call_operand.vmem [shape: bf16[16,4], index: 1, kind: input, shape index: {}]
  %s2 = inlined_call_operand.vmem [shape: f32[1,4], index: 2, kind: input, shape index: {}]
  %s3 = inlined_call_operand.vmem [shape: f32[1,4], index: 3, kind: input, shape index: {}]
  %s4 = inlined_call_operand.vmem [shape: bf16[512,4], index: 4, kind: output, shape index: {}]
  %s5 = sld [smem:[#allocation0]]
  $region49: #{tpu_custom_call.1} parent=0
    _
  %s7 = ssub.s32 1, %s5
  %s8 = scalar_select 0, %s7, %s5
  loop: start=0, step=1, limit=4
  $region2: #{tpu_custom_call.1} parent=0 // loop_pre_header
    _
  $region3: #{tpu_custom_call.1} parent=0 // loop_header
    %s10 = sphi 0, %s14
    %p11 = scmp.ge.s32.totalorder %s10, 4
    %s17 = sphi 0, %s29
    %s18 = sphi 0, %s25
    %s19 = sphi 0, %s17
    %s20 = sphi 0, %s18
    %s21 = sphi 0, %s19
    %s22 = sphi 0, %s20
    %s32 = sphi 0, %s34
    %s35 = sphi 0, %s32
    %s36 = sphi 0, %s35
    %s52 = sphi 0, %s36
    %s58 = sphi 0, %s60
    %s61 = sphi 0, %s58
    %s62 = sphi 0, %s61
    %s78 = sphi 0, %s62
    %s84 = sphi 0, %s86
    %s87 = sphi 0, %s84
    %s88 = sphi 0, %s87
    %s104 = sphi 0, %s88
    %s110 = sphi 0, %s112
    %s113 = sphi 0, %s110
    %s114 = sphi 0, %s113
    %s130 = sphi 0, %s114
    %s138 = sphi 0, %s140
    %s141 = sphi 0, %s138
    %s142 = sphi 0, %s141
    %s158 = sphi 0, %s142
  $region4: #{tpu_custom_call.1} parent=0 // loop_header_branch
    %13 = sbr.rel (%p11) target = $region8
  $region5: #{tpu_custom_call.1} parent=0 // loop_body
    %s15 = ssub.s32 %s10, 1
    %s16 = ssub.s32 %s10, 2
    %s23 = sadd.s32 1, %s18
    %p24 = scmp.ge.s32.totalorder %s23, 1
    %s25 = scalar_select %p24, 0, %s23
    %s26 = sadd.s32 1, %s17
    %s27 = scalar_select %p24, %s26, %s17
    %p28 = scmp.ge.s32.totalorder %s27, 2
    %s29 = scalar_select %p28, 0, %s27
    %s30 = ssub.s32 %s17, %s29
    %p31 = scmp.eq.s32.totalorder %s30, 0
    %s33 = sadd.s32 %s32, 1
    %s34 = scalar_select %p31, %s32, %s33
    %p37 = pneg %p31
    %p38 = scmp.eq.s32.totalorder %s10, 1
    %p39 = por %p37, %p38
    %p40 = scmp.ne.s32.totalorder %s32, %s35
    %p41 = scmp.eq.s32.totalorder %s10, 0
    %p42 = por %p40, %p41
    %p43 = scmp.ne.s32.totalorder %s32, %s35
    %p44 = scmp.eq.s32.totalorder %s15, 1
    %p45 = por %p43, %p44
    %p46 = scmp.ne.s32.totalorder %s35, %s36
    %p47 = scmp.eq.s32.totalorder %s15, 0
    %p48 = por %p46, %p47
    %p49 = scmp.ne.s32.totalorder %s35, %s36
    %p50 = scmp.eq.s32.totalorder %s16, 1
    %p51 = por %p49, %p50
    %p53 = scmp.ne.s32.totalorder %s36, %s52
    %p54 = scmp.eq.s32.totalorder %s16, 0
    %p55 = por %p53, %p54
    %s56 = ssub.s32 %s18, %s25
    %p57 = scmp.eq.s32.totalorder %s56, 0
    %s59 = sadd.s32 %s58, 1
    %s60 = scalar_select %p57, %s58, %s59
    %p63 = pneg %p57
    %p64 = scmp.eq.s32.totalorder %s10, 1
    %p65 = por %p63, %p64
    %p66 = scmp.ne.s32.totalorder %s58, %s61
    %p67 = scmp.eq.s32.totalorder %s10, 0
    %p68 = por %p66, %p67
    %p69 = scmp.ne.s32.totalorder %s58, %s61
    %p70 = scmp.eq.s32.totalorder %s15, 1
    %p71 = por %p69, %p70
    %p72 = scmp.ne.s32.totalorder %s61, %s62
    %p73 = scmp.eq.s32.totalorder %s15, 0
    %p74 = por %p72, %p73
    %p75 = scmp.ne.s32.totalorder %s61, %s62
    %p76 = scmp.eq.s32.totalorder %s16, 1
    %p77 = por %p75, %p76
    %p79 = scmp.ne.s32.totalorder %s62, %s78
    %p80 = scmp.eq.s32.totalorder %s16, 0
    %p81 = por %p79, %p80
    %s82 = ssub.s32 %s18, %s25
    %p83 = scmp.eq.s32.totalorder %s82, 0
    %s85 = sadd.s32 %s84, 1
    %s86 = scalar_select %p83, %s84, %s85
    %p89 = pneg %p83
    %p90 = scmp.eq.s32.totalorder %s10, 1
    %p91 = por %p89, %p90
    %p92 = scmp.ne.s32.totalorder %s84, %s87
    %p93 = scmp.eq.s32.totalorder %s10, 0
    %p94 = por %p92, %p93
    %p95 = scmp.ne.s32.totalorder %s84, %s87
    %p96 = scmp.eq.s32.totalorder %s15, 1
    %p97 = por %p95, %p96
    %p98 = scmp.ne.s32.totalorder %s87, %s88
    %p99 = scmp.eq.s32.totalorder %s15, 0
    %p100 = por %p98, %p99
    %p101 = scmp.ne.s32.totalorder %s87, %s88
    %p102 = scmp.eq.s32.totalorder %s16, 1
    %p103 = por %p101, %p102
    %p105 = scmp.ne.s32.totalorder %s88, %s104
    %p106 = scmp.eq.s32.totalorder %s16, 0
    %p107 = por %p105, %p106
    %s108 = ssub.s32 %s18, %s25
    %p109 = scmp.eq.s32.totalorder %s108, 0
    %s111 = sadd.s32 %s110, 1
    %s112 = scalar_select %p109, %s110, %s111
    %p115 = pneg %p109
    %p116 = scmp.eq.s32.totalorder %s10, 1
    %p117 = por %p115, %p116
    %p118 = scmp.ne.s32.totalorder %s110, %s113
    %p119 = scmp.eq.s32.totalorder %s10, 0
    %p120 = por %p118, %p119
    %p121 = scmp.ne.s32.totalorder %s110, %s113
    %p122 = scmp.eq.s32.totalorder %s15, 1
    %p123 = por %p121, %p122
    %p124 = scmp.ne.s32.totalorder %s113, %s114
    %p125 = scmp.eq.s32.totalorder %s15, 0
    %p126 = por %p124, %p125
    %p127 = scmp.ne.s32.totalorder %s113, %s114
    %p128 = scmp.eq.s32.totalorder %s16, 1
    %p129 = por %p127, %p128
    %p131 = scmp.ne.s32.totalorder %s114, %s130
    %p132 = scmp.eq.s32.totalorder %s16, 0
    %p133 = por %p131, %p132
    %s134 = ssub.s32 %s17, %s29
    %s135 = ssub.s32 %s18, %s25
    %s136 = sor.u32 %s134, %s135
    %p137 = scmp.eq.s32.totalorder %s136, 0
    %s139 = sadd.s32 %s138, 1
    %s140 = scalar_select %p137, %s138, %s139
    %p143 = pneg %p137
    %p144 = scmp.eq.s32.totalorder %s10, 1
    %p145 = por %p143, %p144
    %p146 = scmp.ne.s32.totalorder %s138, %s141
    %p147 = scmp.eq.s32.totalorder %s10, 0
    %p148 = por %p146, %p147
    %p149 = scmp.ne.s32.totalorder %s138, %s141
    %p150 = scmp.eq.s32.totalorder %s15, 1
    %p151 = por %p149, %p150
    %p152 = scmp.ne.s32.totalorder %s141, %s142
    %p153 = scmp.eq.s32.totalorder %s15, 0
    %p154 = por %p152, %p153
    %p155 = scmp.ne.s32.totalorder %s141, %s142
    %p156 = scmp.eq.s32.totalorder %s16, 1
    %p157 = por %p155, %p156
    %p159 = scmp.ne.s32.totalorder %s142, %s158
    %p160 = scmp.eq.s32.totalorder %s16, 0
    %p161 = por %p159, %p160
    %p162 = scmp.le.s32.totalorder 1, %s10
    %p163 = scmp.lt.s32.totalorder %s10, 3
    %p164 = pnand %p162, %p163
    %p165 = pneg %p164
    // Predicated region
    $region9: #{tpu_custom_call.1} parent=5 // pred_check
      _
    $region10: #{tpu_custom_call.1} parent=5 // pred_check_branch
      %167 = sbr.rel (%p164) target = $region12
    $region11: #{tpu_custom_call.1} parent=5 // pred_region
      %s168 = ssub.s32 %s10, 1
      // Predicated region
      $region13: #{tpu_custom_call.1} parent=11 // pred_check
        %p169 = pneg %p74
      $region14: #{tpu_custom_call.1} parent=11 // pred_check_branch
        %171 = sbr.rel (%p169) target = $region16
      $region15: #{tpu_custom_call.1} parent=11 // pred_region
        %p172 = scmp.lt.s32.totalorder %s20, 0
        %s173 = scalar_select %p172, %s20, 0
        %s174 = smul.addr %s173, 4
        %s175 = scalar_lea.vmem %s1, %s174
      $region16: #{tpu_custom_call.1} parent=11 // pred_fallthru
        _
      // Predicated region
      $region17: #{tpu_custom_call.1} parent=11 // pred_check
        %p176 = pneg %p100
      $region18: #{tpu_custom_call.1} parent=11 // pred_check_branch
        %178 = sbr.rel (%p176) target = $region20
      $region19: #{tpu_custom_call.1} parent=11 // pred_region
        %p179 = scmp.lt.s32.totalorder %s20, 0
        %s180 = scalar_select %p179, %s20, 0
        %s181 = scalar_lea.vmem %s2, %s180
      $region20: #{tpu_custom_call.1} parent=11 // pred_fallthru
        _
      // Predicated region
      $region21: #{tpu_custom_call.1} parent=11 // pred_check
        %p182 = pneg %p126
      $region22: #{tpu_custom_call.1} parent=11 // pred_check_branch
        %184 = sbr.rel (%p182) target = $region24
      $region23: #{tpu_custom_call.1} parent=11 // pred_region
        %p185 = scmp.lt.s32.totalorder %s20, 0
        %s186 = scalar_select %p185, %s20, 0
        %s187 = scalar_lea.vmem %s3, %s186
      $region24: #{tpu_custom_call.1} parent=11 // pred_fallthru
        _
    $region12: #{tpu_custom_call.1} parent=5 // pred_fallthru
      _
    %p188 = scmp.lt.s32.totalorder %s10, 2
    // Predicated region
    $region25: #{tpu_custom_call.1} parent=5 // pred_check
      %p189 = pneg %p188
    $region26: #{tpu_custom_call.1} parent=5 // pred_check_branch
      %191 = sbr.rel (%p189) target = $region28
    $region27: #{tpu_custom_call.1} parent=5 // pred_region
      // Predicated region
      $region29: #{tpu_custom_call.1} parent=27 // pred_check
        %p192 = pneg %p42
      $region30: #{tpu_custom_call.1} parent=27 // pred_check_branch
        %194 = sbr.rel (%p192) target = $region32
      $region31: #{tpu_custom_call.1} parent=27 // pred_region
        %s195 = smul.u32 32, %s17
        %p196 = scmp.lt.s32.totalorder %s195, 63
        %s197 = scalar_select %p196, %s195, 63
        %s198 = smul.addr %s197, 4
        %s199 = scalar_lea.vmem %s0, %s198
        %s200 = smul.u32 32, %s17
      $region32: #{tpu_custom_call.1} parent=27 // pred_fallthru
        _
    $region28: #{tpu_custom_call.1} parent=5 // pred_fallthru
      _
    %p201 = scmp.le.s32.totalorder 1, %s10
    %p202 = scmp.lt.s32.totalorder %s10, 3
    %p203 = pnand %p201, %p202
    %p204 = pneg %p203
    // Predicated region
    $region33: #{tpu_custom_call.1} parent=5 // pred_check
      _
    $region34: #{tpu_custom_call.1} parent=5 // pred_check_branch
      %206 = sbr.rel (%p203) target = $region36
    $region35: #{tpu_custom_call.1} parent=5 // pred_region
      %s207 = ssub.s32 %s10, 1
      %s208 = smul.u32 32, %s19
      %p209 = scmp.lt.s32.totalorder %s208, 63
      %s210 = scalar_select %p209, %s208, 63
      %s211 = smul.addr %s210, 4
      %s212 = scalar_lea.vmem %s0, %s211
      %p213 = pneg %p48
      %p214 = pneg %p45
      %p215 = scmp.lt.s32.totalorder %s20, 0
      %s216 = scalar_select %p215, %s20, 0
      %s217 = smul.addr %s216, 4
      %s218 = scalar_lea.vmem %s1, %s217
      %p219 = pneg %p74
      %p220 = pneg %p71
      %p221 = scmp.lt.s32.totalorder %s20, 0
      %s222 = scalar_select %p221, %s20, 0
      %s223 = scalar_lea.vmem %s2, %s222
      %p224 = pneg %p100
      %p225 = pneg %p97
      %p226 = scmp.lt.s32.totalorder %s20, 0
      %s227 = scalar_select %p226, %s20, 0
      %s228 = scalar_lea.vmem %s3, %s227
      %p229 = pneg %p126
      %p230 = pneg %p123
      %p231 = pneg %p154
      %p232 = pneg %p151
      %s233 = smul.u32 32, %s19
      %p234 = scmp.lt.s32.totalorder %s233, 63
      %s235 = scalar_select %p234, %s233, 63
      %p236 = scmp.lt.s32.totalorder %s20, 0
      %s237 = scalar_select %p236, %s20, 0
      %s238 = sadd.s32 %s237, %s235
      %s239 = smul.addr %s238, 4
      %s240 = scalar_lea.vmem %s4, %s239
      %s241 = smul.u32 32, %s19
      %p242 = scmp.lt.s32.totalorder %s241, 63
      %s243 = scalar_select %p242, %s241, 63
      %s244 = smul.addr %s243, 4
      %s245 = scalar_lea.vmem %s0, %s244
      %s246 = smul.u32 32, %s19
      %p247 = scmp.lt.s32.totalorder %s20, 0
      %s248 = scalar_select %p247, %s20, 0
      %s249 = smul.addr %s248, 4
      %s250 = scalar_lea.vmem %s1, %s249
      %p251 = scmp.lt.s32.totalorder %s20, 0
      %s252 = scalar_select %p251, %s20, 0
      %s253 = scalar_lea.vmem %s2, %s252
      %p254 = scmp.lt.s32.totalorder %s20, 0
      %s255 = scalar_select %p254, %s20, 0
      %s256 = scalar_lea.vmem %s3, %s255
      %s257 = smul.u32 32, %s19
      %p258 = scmp.lt.s32.totalorder %s257, 63
      %s259 = scalar_select %p258, %s257, 63
      %p260 = scmp.lt.s32.totalorder %s20, 0
      %s261 = scalar_select %p260, %s20, 0
      %s262 = sadd.s32 %s261, %s259
      %s263 = smul.addr %s262, 4
      %s264 = scalar_lea.vmem %s4, %s263
      %s265 = smul.u32 32, %s19
      %v267 = vld [vmem:[%s245] sm:$0xf]
      %v268 = vld [vmem:[%s245 + $0x4] sm:$0xf]
      %v269 = vld [vmem:[%s245 + $0x8] sm:$0xf]
      %v270 = vld [vmem:[%s245 + $0xc] sm:$0xf]
      %v271 = vld [vmem:[%s245 + $0x10] sm:$0xf]
      %v272 = vld [vmem:[%s245 + $0x14] sm:$0xf]
      %v273 = vld [vmem:[%s245 + $0x18] sm:$0xf]
      %v274 = vld [vmem:[%s245 + $0x1c] sm:$0xf]
      %v275 = vld [vmem:[%s245 + $0x20] sm:$0xf]
      %v276 = vld [vmem:[%s245 + $0x24] sm:$0xf]
      %v277 = vld [vmem:[%s245 + $0x28] sm:$0xf]
      %v278 = vld [vmem:[%s245 + $0x2c] sm:$0xf]
      %v279 = vld [vmem:[%s245 + $0x30] sm:$0xf]
      %v280 = vld [vmem:[%s245 + $0x34] sm:$0xf]
      %v281 = vld [vmem:[%s245 + $0x38] sm:$0xf]
      %v282 = vld [vmem:[%s245 + $0x3c] sm:$0xf]
      %v283 = vld [vmem:[%s245 + $0x40] sm:$0xf]
      %v284 = vld [vmem:[%s245 + $0x44] sm:$0xf]
      %v285 = vld [vmem:[%s245 + $0x48] sm:$0xf]
      %v286 = vld [vmem:[%s245 + $0x4c] sm:$0xf]
      %v287 = vld [vmem:[%s245 + $0x50] sm:$0xf]
      %v288 = vld [vmem:[%s245 + $0x54] sm:$0xf]
      %v289 = vld [vmem:[%s245 + $0x58] sm:$0xf]
      %v290 = vld [vmem:[%s245 + $0x5c] sm:$0xf]
      %v291 = vld [vmem:[%s245 + $0x60] sm:$0xf]
      %v292 = vld [vmem:[%s245 + $0x64] sm:$0xf]
      %v293 = vld [vmem:[%s245 + $0x68] sm:$0xf]
      %v294 = vld [vmem:[%s245 + $0x6c] sm:$0xf]
      %v295 = vld [vmem:[%s245 + $0x70] sm:$0xf]
      %v296 = vld [vmem:[%s245 + $0x74] sm:$0xf]
      %v297 = vld [vmem:[%s245 + $0x78] sm:$0xf]
      %v298 = vld [vmem:[%s245 + $0x7c] sm:$0xf]
      %v299 = vld [vmem:[%s250] sm:$0xf]
      %v300 = vld [vmem:[%s250 + $0x4] sm:$0xf]
      %v333 = vunpack.c.l.b16 %v267
      %v334 = vunpack.c.l.b16 %v268
      %v335 = vunpack.c.l.b16 %v269
      %v336 = vunpack.c.l.b16 %v270
      %v337 = vunpack.c.l.b16 %v271
      %v338 = vunpack.c.l.b16 %v272
      %v339 = vunpack.c.l.b16 %v273
      %v340 = vunpack.c.l.b16 %v274
      %v341 = vunpack.c.l.b16 %v275
      %v342 = vunpack.c.l.b16 %v276
      %v343 = vunpack.c.l.b16 %v277
      %v344 = vunpack.c.l.b16 %v278
      %v345 = vunpack.c.l.b16 %v279
      %v346 = vunpack.c.l.b16 %v280
      %v347 = vunpack.c.l.b16 %v281
      %v348 = vunpack.c.l.b16 %v282
      %v349 = vunpack.c.l.b16 %v283
      %v350 = vunpack.c.l.b16 %v284
      %v351 = vunpack.c.l.b16 %v285
      %v352 = vunpack.c.l.b16 %v286
      %v353 = vunpack.c.l.b16 %v287
      %v354 = vunpack.c.l.b16 %v288
      %v355 = vunpack.c.l.b16 %v289
      %v356 = vunpack.c.l.b16 %v290
      %v357 = vunpack.c.l.b16 %v291
      %v358 = vunpack.c.l.b16 %v292
      %v359 = vunpack.c.l.b16 %v293
      %v360 = vunpack.c.l.b16 %v294
      %v361 = vunpack.c.l.b16 %v295
      %v362 = vunpack.c.l.b16 %v296
      %v363 = vunpack.c.l.b16 %v297
      %v364 = vunpack.c.l.b16 %v298
      %v365 = vpack.c.b16 %v334, %v333
      %v366 = vpack.c.b16 %v336, %v335
      %v367 = vpack.c.b16 %v338, %v337
      %v368 = vpack.c.b16 %v340, %v339
      %v369 = vpack.c.b16 %v342, %v341
      %v370 = vpack.c.b16 %v344, %v343
      %v371 = vpack.c.b16 %v346, %v345
      %v372 = vpack.c.b16 %v348, %v347
      %v373 = vpack.c.b16 %v350, %v349
      %v374 = vpack.c.b16 %v352, %v351
      %v375 = vpack.c.b16 %v354, %v353
      %v376 = vpack.c.b16 %v356, %v355
      %v377 = vpack.c.b16 %v358, %v357
      %v378 = vpack.c.b16 %v360, %v359
      %v379 = vpack.c.b16 %v362, %v361
      %v380 = vpack.c.b16 %v364, %v363
      %v383 = vunpack.c.l.b16 %v299
      %v384 = vunpack.c.l.b16 %v300
      %v385 = vpack.c.b16 %v384, %v383
      %vm387 = vcmask 130048
      %v389 = vsel %vm387, %v365, 0
      %v392 = vsel %vm387, %v366, 0
      %v395 = vsel %vm387, %v367, 0
      %v398 = vsel %vm387, %v368, 0
      %v401 = vsel %vm387, %v369, 0
      %v404 = vsel %vm387, %v370, 0
      %v407 = vsel %vm387, %v371, 0
      %v410 = vsel %vm387, %v372, 0
      %v413 = vsel %vm387, %v373, 0
      %v416 = vsel %vm387, %v374, 0
      %v419 = vsel %vm387, %v375, 0
      %v422 = vsel %vm387, %v376, 0
      %v425 = vsel %vm387, %v377, 0
      %v428 = vsel %vm387, %v378, 0
      %v431 = vsel %vm387, %v379, 0
      %v434 = vsel %vm387, %v380, 0
      %436 = vmatprep.subr.bf16.mxu0 0
      %437 = vmatpush1.bf16.msra.mxu0 %v385
      %438 = vmatprep.subr.bf16.mxu0 0
      %439 = vmatpush1.bf16.msra.mxu0 0
      %440 = vmatprep.subr.bf16.mxu0 0
      %441 = vmatpush1.bf16.msra.mxu0 0
      %442 = vmatprep.subr.bf16.mxu0 0
      %443 = vmatpush1.bf16.msra.mxu0 0
      %444 = vmatprep.subr.bf16.mxu0 0
      %445 = vmatpush1.bf16.msra.mxu0 0
      %446 = vmatprep.subr.bf16.mxu0 0
      %447 = vmatpush1.bf16.msra.mxu0 0
      %448 = vmatprep.subr.bf16.mxu0 0
      %449 = vmatpush1.bf16.msra.mxu0 0
      %450 = vmatprep.subr.bf16.mxu0 0
      %451 = vmatpush1.bf16.msra.mxu0 0
      %452 = vmatprep.subr.bf16.mxu0 0
      %453 = vmatpush1.bf16.msra.mxu0 0
      %454 = vmatprep.subr.bf16.mxu0 0
      %455 = vmatpush1.bf16.msra.mxu0 0
      %456 = vmatprep.subr.bf16.mxu0 0
      %457 = vmatpush1.bf16.msra.mxu0 0
      %458 = vmatprep.subr.bf16.mxu0 0
      %459 = vmatpush1.bf16.msra.mxu0 0
      %460 = vmatprep.subr.bf16.mxu0 0
      %461 = vmatpush1.bf16.msra.mxu0 0
      %462 = vmatprep.subr.bf16.mxu0 0
      %463 = vmatpush1.bf16.msra.mxu0 0
      %464 = vmatprep.subr.bf16.mxu0 0
      %465 = vmatpush1.bf16.msra.mxu0 0
      %466 = vmatprep.subr.bf16.mxu0 0
      %467 = vmatpush1.bf16.msra.mxu0 0
      %468 = vmatprep.mubr.bf16.mxu0 0
      %469 = vmatmul.mubr.bf16.gmra.mrb[0].mxu0 %v389
      %v470 = vpop.f32.mrb[0].mxu0
      %v471 = vadd.f32 0.0, %v470
      %v472 = vpop.f32.mrb[0].mxu0
      %v473 = vpop.f32.mrb[0].mxu0
      %v474 = vadd.f32 0.0, %v473
      %v475 = vpop.f32.mrb[0].mxu0
      %476 = vmatprep.mubr.bf16.mxu0 0
      %477 = vmatmul.mubr.bf16.gmra.mrb[0].mxu0 %v392
      %v478 = vpop.f32.mrb[0].mxu0
      %v479 = vadd.f32 0.0, %v478
      %v480 = vpop.f32.mrb[0].mxu0
      %v481 = vpop.f32.mrb[0].mxu0
      %v482 = vadd.f32 0.0, %v481
      %v483 = vpop.f32.mrb[0].mxu0
      %484 = vmatprep.mubr.bf16.mxu0 0
      %485 = vmatmul.mubr.bf16.gmra.mrb[0].mxu0 %v395
      %v486 = vpop.f32.mrb[0].mxu0
      %v487 = vadd.f32 0.0, %v486
      %v488 = vpop.f32.mrb[0].mxu0
      %v489 = vpop.f32.mrb[0].mxu0
      %v490 = vadd.f32 0.0, %v489
      %v491 = vpop.f32.mrb[0].mxu0
      %492 = vmatprep.mubr.bf16.mxu0 0
      %493 = vmatmul.mubr.bf16.gmra.mrb[0].mxu0 %v398
      %v494 = vpop.f32.mrb[0].mxu0
      %v495 = vadd.f32 0.0, %v494
      %v496 = vpop.f32.mrb[0].mxu0
      %v497 = vpop.f32.mrb[0].mxu0
      %v498 = vadd.f32 0.0, %v497
      %v499 = vpop.f32.mrb[0].mxu0
      %500 = vmatprep.mubr.bf16.mxu0 0
      %501 = vmatmul.mubr.bf16.gmra.mrb[0].mxu0 %v401
      %v502 = vpop.f32.mrb[0].mxu0
      %v503 = vadd.f32 0.0, %v502
      %v504 = vpop.f32.mrb[0].mxu0
      %v505 = vpop.f32.mrb[0].mxu0
      %v506 = vadd.f32 0.0, %v505
      %v507 = vpop.f32.mrb[0].mxu0
      %508 = vmatprep.mubr.bf16.mxu0 0
      %509 = vmatmul.mubr.bf16.gmra.mrb[0].mxu0 %v404
      %v510 = vpop.f32.mrb[0].mxu0
      %v511 = vadd.f32 0.0, %v510
      %v512 = vpop.f32.mrb[0].mxu0
      %v513 = vpop.f32.mrb[0].mxu0
      %v514 = vadd.f32 0.0, %v513
      %v515 = vpop.f32.mrb[0].mxu0
      %516 = vmatprep.mubr.bf16.mxu0 0
      %517 = vmatmul.mubr.bf16.gmra.mrb[0].mxu0 %v407
      %v518 = vpop.f32.mrb[0].mxu0
      %v519 = vadd.f32 0.0, %v518
      %v520 = vpop.f32.mrb[0].mxu0
      %v521 = vpop.f32.mrb[0].mxu0
      %v522 = vadd.f32 0.0, %v521
      %v523 = vpop.f32.mrb[0].mxu0
      %524 = vmatprep.mubr.bf16.mxu0 0
      %525 = vmatmul.mubr.bf16.gmra.mrb[0].mxu0 %v410
      %v526 = vpop.f32.mrb[0].mxu0
      %v527 = vadd.f32 0.0, %v526
      %v528 = vpop.f32.mrb[0].mxu0
      %v529 = vpop.f32.mrb[0].mxu0
      %v530 = vadd.f32 0.0, %v529
      %v531 = vpop.f32.mrb[0].mxu0
      %532 = vmatprep.mubr.bf16.mxu0 0
      %533 = vmatmul.mubr.bf16.gmra.mrb[0].mxu0 %v413
      %v534 = vpop.f32.mrb[0].mxu0
      %v535 = vadd.f32 0.0, %v534
      %v536 = vpop.f32.mrb[0].mxu0
      %v537 = vpop.f32.mrb[0].mxu0
      %v538 = vadd.f32 0.0, %v537
      %v539 = vpop.f32.mrb[0].mxu0
      %540 = vmatprep.mubr.bf16.mxu0 0
      %541 = vmatmul.mubr.bf16.gmra.mrb[0].mxu0 %v416
      %v542 = vpop.f32.mrb[0].mxu0
      %v543 = vadd.f32 0.0, %v542
      %v544 = vpop.f32.mrb[0].mxu0
      %v545 = vpop.f32.mrb[0].mxu0
      %v546 = vadd.f32 0.0, %v545
      %v547 = vpop.f32.mrb[0].mxu0
      %548 = vmatprep.mubr.bf16.mxu0 0
      %549 = vmatmul.mubr.bf16.gmra.mrb[0].mxu0 %v419
      %v550 = vpop.f32.mrb[0].mxu0
      %v551 = vadd.f32 0.0, %v550
      %v552 = vpop.f32.mrb[0].mxu0
      %v553 = vpop.f32.mrb[0].mxu0
      %v554 = vadd.f32 0.0, %v553
      %v555 = vpop.f32.mrb[0].mxu0
      %556 = vmatprep.mubr.bf16.mxu0 0
      %557 = vmatmul.mubr.bf16.gmra.mrb[0].mxu0 %v422
      %v558 = vpop.f32.mrb[0].mxu0
      %v559 = vadd.f32 0.0, %v558
      %v560 = vpop.f32.mrb[0].mxu0
      %v561 = vpop.f32.mrb[0].mxu0
      %v562 = vadd.f32 0.0, %v561
      %v563 = vpop.f32.mrb[0].mxu0
      %564 = vmatprep.mubr.bf16.mxu0 0
      %565 = vmatmul.mubr.bf16.gmra.mrb[0].mxu0 %v425
      %v566 = vpop.f32.mrb[0].mxu0
      %v567 = vadd.f32 0.0, %v566
      %v568 = vpop.f32.mrb[0].mxu0
      %v569 = vpop.f32.mrb[0].mxu0
      %v570 = vadd.f32 0.0, %v569
      %v571 = vpop.f32.mrb[0].mxu0
      %572 = vmatprep.mubr.bf16.mxu0 0
      %573 = vmatmul.mubr.bf16.gmra.mrb[0].mxu0 %v428
      %v574 = vpop.f32.mrb[0].mxu0
      %v575 = vadd.f32 0.0, %v574
      %v576 = vpop.f32.mrb[0].mxu0
      %v577 = vpop.f32.mrb[0].mxu0
      %v578 = vadd.f32 0.0, %v577
      %v579 = vpop.f32.mrb[0].mxu0
      %580 = vmatprep.mubr.bf16.mxu0 0
      %581 = vmatmul.mubr.bf16.gmra.mrb[0].mxu0 %v431
      %v582 = vpop.f32.mrb[0].mxu0
      %v583 = vadd.f32 0.0, %v582
      %v584 = vpop.f32.mrb[0].mxu0
      %v585 = vpop.f32.mrb[0].mxu0
      %v586 = vadd.f32 0.0, %v585
      %v587 = vpop.f32.mrb[0].mxu0
      %588 = vmatprep.mubr.bf16.mxu0 0
      %589 = vmatmul.mubr.bf16.gmra.mrb[0].mxu0 %v434
      %v590 = vpop.f32.mrb[0].mxu0
      %v591 = vadd.f32 0.0, %v590
      %v592 = vpop.f32.mrb[0].mxu0
      %v593 = vpop.f32.mrb[0].mxu0
      %v594 = vadd.f32 0.0, %v593
      %v595 = vpop.f32.mrb[0].mxu0
      %596 = vdwg.mxu0
      %v597 = vld [vmem:[%s253] sm:$0x1]
      %v599 = vlaneseq
      %v600 = vshrl.u32 %v599, 7
      %v601 = vsub.s32 0, %v600
      %v602 = vrot.slane %v597, %v601
      %v604 = vmul.f32 %v471, %v602
      %v605 = vmul.f32 %v474, %v602
      %v606 = vmul.f32 %v479, %v602
      %v607 = vmul.f32 %v482, %v602
      %v608 = vmul.f32 %v487, %v602
      %v609 = vmul.f32 %v490, %v602
      %v610 = vmul.f32 %v495, %v602
      %v611 = vmul.f32 %v498, %v602
      %v612 = vmul.f32 %v503, %v602
      %v613 = vmul.f32 %v506, %v602
      %v614 = vmul.f32 %v511, %v602
      %v615 = vmul.f32 %v514, %v602
      %v616 = vmul.f32 %v519, %v602
      %v617 = vmul.f32 %v522, %v602
      %v618 = vmul.f32 %v527, %v602
      %v619 = vmul.f32 %v530, %v602
      %v620 = vmul.f32 %v535, %v602
      %v621 = vmul.f32 %v538, %v602
      %v622 = vmul.f32 %v543, %v602
      %v623 = vmul.f32 %v546, %v602
      %v624 = vmul.f32 %v551, %v602
      %v625 = vmul.f32 %v554, %v602
      %v626 = vmul.f32 %v559, %v602
      %v627 = vmul.f32 %v562, %v602
      %v628 = vmul.f32 %v567, %v602
      %v629 = vmul.f32 %v570, %v602
      %v630 = vmul.f32 %v575, %v602
      %v631 = vmul.f32 %v578, %v602
      %v632 = vmul.f32 %v583, %v602
      %v633 = vmul.f32 %v586, %v602
      %v634 = vmul.f32 %v591, %v602
      %v635 = vmul.f32 %v594, %v602
      %v636 = vld [vmem:[%s256] sm:$0x1]
      %v638 = vlaneseq
      %v639 = vshrl.u32 %v638, 7
      %v640 = vsub.s32 0, %v639
      %v641 = vrot.slane %v636, %v640
      %v643 = vadd.f32 %v604, %v641
      %v644 = vadd.f32 %v605, %v641
      %v645 = vadd.f32 %v606, %v641
      %v646 = vadd.f32 %v607, %v641
      %v647 = vadd.f32 %v608, %v641
      %v648 = vadd.f32 %v609, %v641
      %v649 = vadd.f32 %v610, %v641
      %v650 = vadd.f32 %v611, %v641
      %v651 = vadd.f32 %v612, %v641
      %v652 = vadd.f32 %v613, %v641
      %v653 = vadd.f32 %v614, %v641
      %v654 = vadd.f32 %v615, %v641
      %v655 = vadd.f32 %v616, %v641
      %v656 = vadd.f32 %v617, %v641
      %v657 = vadd.f32 %v618, %v641
      %v658 = vadd.f32 %v619, %v641
      %v659 = vadd.f32 %v620, %v641
      %v660 = vadd.f32 %v621, %v641
      %v661 = vadd.f32 %v622, %v641
      %v662 = vadd.f32 %v623, %v641
      %v663 = vadd.f32 %v624, %v641
      %v664 = vadd.f32 %v625, %v641
      %v665 = vadd.f32 %v626, %v641
      %v666 = vadd.f32 %v627, %v641
      %v667 = vadd.f32 %v628, %v641
      %v668 = vadd.f32 %v629, %v641
      %v669 = vadd.f32 %v630, %v641
      %v670 = vadd.f32 %v631, %v641
      %v671 = vadd.f32 %v632, %v641
      %v672 = vadd.f32 %v633, %v641
      %v673 = vadd.f32 %v634, %v641
      %v674 = vadd.f32 %v635, %v641
      %v675 = vmax.f32 %v643, 0.0
      %v676 = vmax.f32 %v644, 0.0
      %v677 = vmax.f32 %v645, 0.0
      %v678 = vmax.f32 %v646, 0.0
      %v679 = vmax.f32 %v647, 0.0
      %v680 = vmax.f32 %v648, 0.0
      %v681 = vmax.f32 %v649, 0.0
      %v682 = vmax.f32 %v650, 0.0
      %v683 = vmax.f32 %v651, 0.0
      %v684 = vmax.f32 %v652, 0.0
      %v685 = vmax.f32 %v653, 0.0
      %v686 = vmax.f32 %v654, 0.0
      %v687 = vmax.f32 %v655, 0.0
      %v688 = vmax.f32 %v656, 0.0
      %v689 = vmax.f32 %v657, 0.0
      %v690 = vmax.f32 %v658, 0.0
      %v691 = vmax.f32 %v659, 0.0
      %v692 = vmax.f32 %v660, 0.0
      %v693 = vmax.f32 %v661, 0.0
      %v694 = vmax.f32 %v662, 0.0
      %v695 = vmax.f32 %v663, 0.0
      %v696 = vmax.f32 %v664, 0.0
      %v697 = vmax.f32 %v665, 0.0
      %v698 = vmax.f32 %v666, 0.0
      %v699 = vmax.f32 %v667, 0.0
      %v700 = vmax.f32 %v668, 0.0
      %v701 = vmax.f32 %v669, 0.0
      %v702 = vmax.f32 %v670, 0.0
      %v703 = vmax.f32 %v671, 0.0
      %v704 = vmax.f32 %v672, 0.0
      %v705 = vmax.f32 %v673, 0.0
      %v706 = vmax.f32 %v674, 0.0
      %v707 = vpack.c.bf16 %v676, %v675
      %v708 = vpack.c.bf16 %v678, %v677
      %v709 = vpack.c.bf16 %v680, %v679
      %v710 = vpack.c.bf16 %v682, %v681
      %v711 = vpack.c.bf16 %v684, %v683
      %v712 = vpack.c.bf16 %v686, %v685
      %v713 = vpack.c.bf16 %v688, %v687
      %v714 = vpack.c.bf16 %v690, %v689
      %v715 = vpack.c.bf16 %v692, %v691
      %v716 = vpack.c.bf16 %v694, %v693
      %v717 = vpack.c.bf16 %v696, %v695
      %v718 = vpack.c.bf16 %v698, %v697
      %v719 = vpack.c.bf16 %v700, %v699
      %v720 = vpack.c.bf16 %v702, %v701
      %v721 = vpack.c.bf16 %v704, %v703
      %v722 = vpack.c.bf16 %v706, %v705
      %v739 = vunpack.c.l.b16 %v707
      %v740 = vunpack.c.h.b16 %v707
      %v741 = vunpack.c.l.b16 %v708
      %v742 = vunpack.c.h.b16 %v708
      %v743 = vunpack.c.l.b16 %v709
      %v744 = vunpack.c.h.b16 %v709
      %v745 = vunpack.c.l.b16 %v710
      %v746 = vunpack.c.h.b16 %v710
      %v747 = vunpack.c.l.b16 %v711
      %v748 = vunpack.c.h.b16 %v711
      %v749 = vunpack.c.l.b16 %v712
      %v750 = vunpack.c.h.b16 %v712
      %v751 = vunpack.c.l.b16 %v713
      %v752 = vunpack.c.h.b16 %v713
      %v753 = vunpack.c.l.b16 %v714
      %v754 = vunpack.c.h.b16 %v714
      %v755 = vunpack.c.l.b16 %v715
      %v756 = vunpack.c.h.b16 %v715
      %v757 = vunpack.c.l.b16 %v716
      %v758 = vunpack.c.h.b16 %v716
      %v759 = vunpack.c.l.b16 %v717
      %v760 = vunpack.c.h.b16 %v717
      %v761 = vunpack.c.l.b16 %v718
      %v762 = vunpack.c.h.b16 %v718
      %v763 = vunpack.c.l.b16 %v719
      %v764 = vunpack.c.h.b16 %v719
      %v765 = vunpack.c.l.b16 %v720
      %v766 = vunpack.c.h.b16 %v720
      %v767 = vunpack.c.l.b16 %v721
      %v768 = vunpack.c.h.b16 %v721
      %v769 = vunpack.c.l.b16 %v722
      %v770 = vunpack.c.h.b16 %v722
      %v771 = vpack.c.b16 %v739, %v739
      %v772 = vpack.c.b16 %v740, %v740
      %v773 = vpack.c.b16 %v741, %v741
      %v774 = vpack.c.b16 %v742, %v742
      %v775 = vpack.c.b16 %v743, %v743
      %v776 = vpack.c.b16 %v744, %v744
      %v777 = vpack.c.b16 %v745, %v745
      %v778 = vpack.c.b16 %v746, %v746
      %v779 = vpack.c.b16 %v747, %v747
      %v780 = vpack.c.b16 %v748, %v748
      %v781 = vpack.c.b16 %v749, %v749
      %v782 = vpack.c.b16 %v750, %v750
      %v783 = vpack.c.b16 %v751, %v751
      %v784 = vpack.c.b16 %v752, %v752
      %v785 = vpack.c.b16 %v753, %v753
      %v786 = vpack.c.b16 %v754, %v754
      %v787 = vpack.c.b16 %v755, %v755
      %v788 = vpack.c.b16 %v756, %v756
      %v789 = vpack.c.b16 %v757, %v757
      %v790 = vpack.c.b16 %v758, %v758
      %v791 = vpack.c.b16 %v759, %v759
      %v792 = vpack.c.b16 %v760, %v760
      %v793 = vpack.c.b16 %v761, %v761
      %v794 = vpack.c.b16 %v762, %v762
      %v795 = vpack.c.b16 %v763, %v763
      %v796 = vpack.c.b16 %v764, %v764
      %v797 = vpack.c.b16 %v765, %v765
      %v798 = vpack.c.b16 %v766, %v766
      %v799 = vpack.c.b16 %v767, %v767
      %v800 = vpack.c.b16 %v768, %v768
      %v801 = vpack.c.b16 %v769, %v769
      %v802 = vpack.c.b16 %v770, %v770
      %vm835 = vcmask 27648
      %836 = vst.msk [vmem:[%s264] sm:$0xf] %vm835, %v771
      %837 = vst.msk [vmem:[%s264 + $0x4] sm:$0xf] %vm835, %v772
      %838 = vst.msk [vmem:[%s264 + $0x8] sm:$0xf] %vm835, %v773
      %839 = vst.msk [vmem:[%s264 + $0xc] sm:$0xf] %vm835, %v774
      %840 = vst.msk [vmem:[%s264 + $0x10] sm:$0xf] %vm835, %v775
      %841 = vst.msk [vmem:[%s264 + $0x14] sm:$0xf] %vm835, %v776
      %842 = vst.msk [vmem:[%s264 + $0x18] sm:$0xf] %vm835, %v777
      %843 = vst.msk [vmem:[%s264 + $0x1c] sm:$0xf] %vm835, %v778
      %844 = vst.msk [vmem:[%s264 + $0x20] sm:$0xf] %vm835, %v779
      %845 = vst.msk [vmem:[%s264 + $0x24] sm:$0xf] %vm835, %v780
      %846 = vst.msk [vmem:[%s264 + $0x28] sm:$0xf] %vm835, %v781
      %847 = vst.msk [vmem:[%s264 + $0x2c] sm:$0xf] %vm835, %v782
      %848 = vst.msk [vmem:[%s264 + $0x30] sm:$0xf] %vm835, %v783
      %849 = vst.msk [vmem:[%s264 + $0x34] sm:$0xf] %vm835, %v784
      %850 = vst.msk [vmem:[%s264 + $0x38] sm:$0xf] %vm835, %v785
      %851 = vst.msk [vmem:[%s264 + $0x3c] sm:$0xf] %vm835, %v786
      %852 = vst.msk [vmem:[%s264 + $0x40] sm:$0xf] %vm835, %v787
      %853 = vst.msk [vmem:[%s264 + $0x44] sm:$0xf] %vm835, %v788
      %854 = vst.msk [vmem:[%s264 + $0x48] sm:$0xf] %vm835, %v789
      %855 = vst.msk [vmem:[%s264 + $0x4c] sm:$0xf] %vm835, %v790
      %856 = vst.msk [vmem:[%s264 + $0x50] sm:$0xf] %vm835, %v791
      %857 = vst.msk [vmem:[%s264 + $0x54] sm:$0xf] %vm835, %v792
      %858 = vst.msk [vmem:[%s264 + $0x58] sm:$0xf] %vm835, %v793
      %859 = vst.msk [vmem:[%s264 + $0x5c] sm:$0xf] %vm835, %v794
      %860 = vst.msk [vmem:[%s264 + $0x60] sm:$0xf] %vm835, %v795
      %861 = vst.msk [vmem:[%s264 + $0x64] sm:$0xf] %vm835, %v796
      %862 = vst.msk [vmem:[%s264 + $0x68] sm:$0xf] %vm835, %v797
      %863 = vst.msk [vmem:[%s264 + $0x6c] sm:$0xf] %vm835, %v798
      %864 = vst.msk [vmem:[%s264 + $0x70] sm:$0xf] %vm835, %v799
      %865 = vst.msk [vmem:[%s264 + $0x74] sm:$0xf] %vm835, %v800
      %866 = vst.msk [vmem:[%s264 + $0x78] sm:$0xf] %vm835, %v801
      %867 = vst.msk [vmem:[%s264 + $0x7c] sm:$0xf] %vm835, %v802
      %s868 = smul.u32 32, %s19
      %p869 = scmp.lt.s32.totalorder %s868, 63
      %s870 = scalar_select %p869, %s868, 63
      %p871 = scmp.lt.s32.totalorder %s20, 0
      %s872 = scalar_select %p871, %s20, 0
      %s873 = sadd.s32 %s872, %s870
      %s874 = smul.addr %s873, 4
      %s875 = scalar_lea.vmem %s4, %s874
      // Predicated region
      $region37: #{tpu_custom_call.1} parent=35 // pred_check
        %p876 = pneg %p151
      $region38: #{tpu_custom_call.1} parent=35 // pred_check_branch
        %878 = sbr.rel (%p876) target = $region40
      $region39: #{tpu_custom_call.1} parent=35 // pred_region
        %s879 = smul.u32 32, %s19
      $region40: #{tpu_custom_call.1} parent=35 // pred_fallthru
        _
    $region36: #{tpu_custom_call.1} parent=5 // pred_fallthru
      _
    %p880 = scmp.le.s32.totalorder 2, %s10
    // Predicated region
    $region41: #{tpu_custom_call.1} parent=5 // pred_check
      %p881 = pneg %p880
    $region42: #{tpu_custom_call.1} parent=5 // pred_check_branch
      %883 = sbr.rel (%p881) target = $region44
    $region43: #{tpu_custom_call.1} parent=5 // pred_region
      %s884 = ssub.s32 %s10, 2
      // Predicated region
      $region45: #{tpu_custom_call.1} parent=43 // pred_check
        %p885 = pneg %p157
      $region46: #{tpu_custom_call.1} parent=43 // pred_check_branch
        %887 = sbr.rel (%p885) target = $region48
      $region47: #{tpu_custom_call.1} parent=43 // pred_region
        %s888 = smul.u32 32, %s21
        %p889 = scmp.lt.s32.totalorder %s888, 63
        %s890 = scalar_select %p889, %s888, 63
        %p891 = scmp.lt.s32.totalorder %s22, 0
        %s892 = scalar_select %p891, %s22, 0
        %s893 = sadd.s32 %s892, %s890
        %s894 = smul.addr %s893, 4
        %s895 = scalar_lea.vmem %s4, %s894
      $region48: #{tpu_custom_call.1} parent=43 // pred_fallthru
        _
    $region44: #{tpu_custom_call.1} parent=5 // pred_fallthru
      _
  $region6: #{tpu_custom_call.1} parent=0 // loop_footer
    %s14 = sadd.s32 1, %s10
  $region7: #{tpu_custom_call.1} parent=0 // loop_footer_branch
    %9 = sbr.rel target = $region3
  $region8: #{tpu_custom_call.1} parent=0 // loop_exit
    _

</llo_original>
